<compile_context>
chip_gen: v6e
topology: v6e:2x2x1
jax: 0.10.0
libtpu: 0.0.40
codegen_flags: <defaults>
</compile_context>

<pallas_src>
import jax
import jax.numpy as jnp
from jax.experimental import pallas as pl
from jax.experimental.pallas import tpu as pltpu


def _round_down(x, m):
    return (x // m) * m


def _make_row_kernel(Rb, multi_row_blocks):
    # scale_ref / bias_ref: whole (rows_pad, 1) f32 arrays resident in VMEM.
    # x_ref / o_ref: (Rb, Lb) lane-dense tiles. One f32 broadcast mul-add.
    def kernel(scale_ref, bias_ref, x_ref, o_ref):
        if multi_row_blocks:
            r0 = pl.multiple_of(pl.program_id(0) * Rb, Rb)
            s = scale_ref[pl.ds(r0, Rb), :]
            b = bias_ref[pl.ds(r0, Rb), :]
        else:
            s = scale_ref[...]
            b = bias_ref[...]
        o_ref[...] = (x_ref[...].astype(jnp.float32) * s + b).astype(o_ref.dtype)

    return kernel


def _make_lane_kernel(Lb, multi_lane_blocks):
    # scale_ref / bias_ref: whole (1, L_pad) f32 arrays resident in VMEM.
    def kernel(scale_ref, bias_ref, x_ref, o_ref):
        if multi_lane_blocks:
            c0 = pl.multiple_of(pl.program_id(1) * Lb, Lb)
            s = scale_ref[:, pl.ds(c0, Lb)]
            b = bias_ref[:, pl.ds(c0, Lb)]
        else:
            s = scale_ref[...]
            b = bias_ref[...]
        o_ref[...] = (x_ref[...].astype(jnp.float32) * s + b).astype(o_ref.dtype)

    return kernel


def _block_sizes(rows, L, itemsize):
    # Sublane packing: 8 rows per f32 vreg, 16 for 16-bit, 32 for 8-bit dtypes.
    sub = {4: 8, 2: 16, 1: 32}.get(itemsize, 8)
    lane = 128

    # ~2 MiB payload per block: double-buffered in+out => ~8 MiB of VMEM, which
    # fits every generation's scoped default (v5e 16 MiB, v6e/v7x 32 MiB) while
    # amortizing the ~0.35 us per-grid-step overhead at v6e/v7x HBM bandwidth.
    target_bytes = 2 << 20

    # Lane block: keep the full plane only if a minimum-height (sub) block fits
    # the payload target; otherwise split the lane axis so that Rb == sub
    # already hits the target (never produces 8-16 MiB blocks for huge planes).
    if L <= lane or L * itemsize * sub <= target_bytes:
        Lb = L
    else:
        Lb = max(lane, _round_down(target_bytes // (sub * itemsize), lane))

    target_rows = max(1, target_bytes // (Lb * itemsize))
    if rows <= sub:
        Rb = rows  # block dim == full array dim is legal
    else:
        Rb = max(sub, min(_round_down(target_rows, sub), _round_down(rows, sub)))

    # Guarantee enough grid steps for DMA/compute overlap and megacore sharding.
    min_steps = 8
    while pl.cdiv(rows, Rb) * pl.cdiv(L, Lb) < min_steps and Lb > lane:
        Lb = max(lane, _round_down(pl.cdiv(Lb, 2), lane))
    while pl.cdiv(rows, Rb) * pl.cdiv(L, Lb) < min_steps and Rb > sub:
        Rb = max(sub, _round_down(pl.cdiv(Rb, 2), sub))

    return Rb, Lb


def tensor_normalization(x, mean, std):
    """(x - mean[None, :, None, None]) / std[None, :, None, None] in NCHW."""
    N, C, H, W = x.shape
    mean = jnp.asarray(mean)
    std = jnp.asarray(std)
    # PyTorch semantics: 0-d -> reshape(1), then broadcast over the channel dim.
    if mean.ndim == 0:
        mean = mean.reshape(1)
    if std.ndim == 0:
        std = std.reshape(1)

    # Per-channel affine params kept in f32 (no cast to the input dtype).
    mean_f32 = jnp.broadcast_to(mean.astype(jnp.float32), (C,))
    std_f32 = jnp.broadcast_to(std.astype(jnp.float32), (C,))
    scale_f32 = 1.0 / std_f32          # 1 / std
    bias_f32 = -mean_f32 * scale_f32   # -mean / std

    itemsize = jnp.dtype(x.dtype).itemsize
    plane = H * W

    # Layout selection (lane-dense 2D view):
    #  * plane >= 128: (N*C, H*W) with per-row params (row = n*C + c).
    #  * plane  < 128: fold C into lanes -> (N, C*H*W) with per-lane params to
    #    keep >=128-wide unmasked stores on tiny feature maps.
    lane_mode = plane < 128
    if lane_mode:
        rows, L = N, C * plane
        x2 = x.reshape(rows, L)
        scale_arr = jnp.repeat(scale_f32, plane).reshape(1, L)
        bias_arr = jnp.repeat(bias_f32, plane).reshape(1, L)
    else:
        rows, L = N * C, plane
        x2 = x.reshape(rows, L)
        scale_arr = jnp.broadcast_to(scale_f32[None, :], (N, C)).reshape(rows, 1)
        bias_arr = jnp.broadcast_to(bias_f32[None, :], (N, C)).reshape(rows, 1)

    Rb, Lb = _block_sizes(rows, L, itemsize)
    grid_r = pl.cdiv(rows, Rb)
    grid_l = pl.cdiv(L, Lb)

    # Pad the (tiny, f32) param arrays so in-kernel dynamic slices on the last
    # partial block never read out of bounds.
    if lane_mode:
        L_pad = grid_l * Lb
        if L_pad > L:
            scale_arr = jnp.pad(scale_arr, ((0, 0), (0, L_pad - L)))
            bias_arr = jnp.pad(bias_arr, ((0, 0), (0, L_pad - L)))
        kernel = _make_lane_kernel(Lb, grid_l > 1)
    else:
        rows_pad = grid_r * Rb
        if rows_pad > rows:
            scale_arr = jnp.pad(scale_arr, ((0, rows_pad - rows), (0, 0)))
            bias_arr = jnp.pad(bias_arr, ((0, rows_pad - rows), (0, 0)))
        kernel = _make_row_kernel(Rb, grid_r > 1)

    # Whole-array param spec: loaded to VMEM once (constant block index).
    param_spec = pl.BlockSpec(scale_arr.shape, lambda i, j: (0, 0))

    block_bytes = Rb * Lb * itemsize
    # in + out double-buffered, plus params and slack; enforced explicitly so
    # the chosen tiles compile on every generation without relying on defaults.
    vmem_limit = int(max(4 << 20, 4 * block_bytes + (2 << 20)))

    cost = pl.CostEstimate(
        flops=2 * rows * L,
        transcendentals=0,
        bytes_accessed=2 * rows * L * itemsize,
    )

    out = pl.pallas_call(
        kernel,
        out_shape=jax.ShapeDtypeStruct((rows, L), x.dtype),
        grid_spec=pltpu.PrefetchScalarGridSpec(
            num_scalar_prefetch=0,
            grid=(grid_r, grid_l),
            in_specs=[
                param_spec,                                   # scale (f32)
                param_spec,                                   # bias  (f32)
                pl.BlockSpec((Rb, Lb), lambda i, j: (i, j)),  # x
            ],
            out_specs=pl.BlockSpec((Rb, Lb), lambda i, j: (i, j)),
        ),
        compiler_params=pltpu.CompilerParams(
            # TODO(synk): on v7x, if the profiler shows a single active TC,
            # switch the leading axis to pltpu.CORE_PARALLEL.
            dimension_semantics=("parallel", "parallel"),
            vmem_limit_bytes=vmem_limit,
        ),
        cost_estimate=cost,
    )(scale_arr, bias_arr, x2)

    return out.reshape(N, C, H, W)


if __name__ == "__main__":
    k0, k1, k2 = jax.random.split(jax.random.PRNGKey(0), 3)

    # Test 1: per-channel mean/std, 16x16 planes (row-param layout).
    N, C, H, W = 2, 4, 16, 16
    x = jax.random.normal(k0, (N, C, H, W), dtype=jnp.float32)
    mean = jnp.array([0.485, 0.456, 0.406, 0.5], dtype=jnp.float32)
    std = jnp.array([0.229, 0.224, 0.225, 0.25], dtype=jnp.float32)
    out = jax.block_until_ready(tensor_normalization(x, mean, std))
    ref = (x - mean[None, :, None, None]) / std[None, :, None, None]
    assert out.shape == (N, C, H, W)
    assert jnp.allclose(out, ref, atol=1e-4, rtol=1e-4)

    # Test 2: tiny 7x7 planes -> lane-param layout (C folded into lanes).
    x2 = jax.random.normal(k1, (2, 3, 7, 7), dtype=jnp.float32)
    mean3 = jnp.array([0.485, 0.456, 0.406], dtype=jnp.float32)
    std3 = jnp.array([0.229, 0.224, 0.225], dtype=jnp.float32)
    out2 = jax.block_until_ready(tensor_normalization(x2, mean3, std3))
    ref2 = (x2 - mean3[None, :, None, None]) / std3[None, :, None, None]
    assert jnp.allclose(out2, ref2, atol=1e-4, rtol=1e-4)

    # Test 3: scalar (0-d) mean/std, matching the PyTorch reshape(1) path.
    x3 = jax.random.normal(k2, (N, C, H, W), dtype=jnp.float32)
    out3 = jax.block_until_ready(
        tensor_normalization(x3, jnp.float32(0.5), jnp.float32(0.25))
    )
    ref3 = (x3 - 0.5) / 0.25
    assert jnp.allclose(out3, ref3, atol=1e-4, rtol=1e-4)

    print("KERNEL_OK")
</pallas_src>

<mosaic_0001>
module attributes {stable_mosaic.version = 11 : i64} {
  func.func @kernel(%arg0: i32, %arg1: i32, %arg2: memref<8x1xf32, #tpu.memory_space<vmem>>, %arg3: memref<8x1xf32, #tpu.memory_space<vmem>>, %arg4: memref<8x128xf32, #tpu.memory_space<vmem>>, %arg5: memref<8x128xf32, #tpu.memory_space<vmem>>) attributes {dimension_semantics = [#tpu.dimension_semantics<parallel>, #tpu.dimension_semantics<parallel>], iteration_bounds = array<i64: 1, 2>, scalar_prefetch = 0 : i64, scratch_operands = 0 : i64, tpu.core_type = #tpu.core_type<tc>, window_params = [{pipeline_mode = #tpu.pipeline_mode<synchronous>, transform_indices = @transform_0, window_bounds = array<i64: 8, 1>}, {pipeline_mode = #tpu.pipeline_mode<synchronous>, transform_indices = @transform_1, window_bounds = array<i64: 8, 1>}, {transform_indices = @transform_2, window_bounds = array<i64: 8, 128>}, {transform_indices = @transform_3, window_bounds = array<i64: 8, 128>}]} {
    %c0 = arith.constant 0 : index
    %c0_0 = arith.constant 0 : index
    %0 = vector.load %arg2[%c0, %c0_0] : memref<8x1xf32, #tpu.memory_space<vmem>>, vector<8x1xf32>
    %c0_1 = arith.constant 0 : index
    %c0_2 = arith.constant 0 : index
    %1 = vector.load %arg3[%c0_1, %c0_2] : memref<8x1xf32, #tpu.memory_space<vmem>>, vector<8x1xf32>
    %c0_3 = arith.constant 0 : index
    %c0_4 = arith.constant 0 : index
    %2 = vector.load %arg4[%c0_3, %c0_4] : memref<8x128xf32, #tpu.memory_space<vmem>>, vector<8x128xf32>
    %3 = vector.broadcast %0 : vector<8x1xf32> to vector<8x128xf32>
    %4 = arith.mulf %2, %3 : vector<8x128xf32>
    %5 = vector.broadcast %1 : vector<8x1xf32> to vector<8x128xf32>
    %6 = arith.addf %4, %5 : vector<8x128xf32>
    %c0_5 = arith.constant 0 : index
    %c0_6 = arith.constant 0 : index
    %7 = vector.load %arg5[%c0_5, %c0_6] : memref<8x128xf32, #tpu.memory_space<vmem>>, vector<8x128xf32>
    tpu.vector_store %arg5[%c0_5, %c0_6], %6 {strides = array<i32>} : memref<8x128xf32, #tpu.memory_space<vmem>>, vector<8x128xf32>,
    return
  }
  func.func @transform_0(%arg0: i32, %arg1: i32) -> (i32, i32) {
    %c0_i32 = arith.constant 0 : i32
    %c0_i32_0 = arith.constant 0 : i32
    %c0_i32_1 = arith.constant 0 : i32
    return %c0_i32, %c0_i32_0 : i32, i32
  }
  func.func @transform_1(%arg0: i32, %arg1: i32) -> (i32, i32) {
    %c0_i32 = arith.constant 0 : i32
    %c0_i32_0 = arith.constant 0 : i32
    %c0_i32_1 = arith.constant 0 : i32
    return %c0_i32, %c0_i32_0 : i32, i32
  }
  func.func @transform_2(%arg0: i32, %arg1: i32) -> (i32, i32) {
    %c0_i32 = arith.constant 0 : i32
    return %arg0, %arg1 : i32, i32
  }
  func.func @transform_3(%arg0: i32, %arg1: i32) -> (i32, i32) {
    %c0_i32 = arith.constant 0 : i32
    return %arg0, %arg1 : i32, i32
  }
}

</mosaic_0001>

<llo_original>
// kernel: tpu_custom_call.1
$region0: #{tpu_custom_call.1}
  #allocation0 [shape = 'u32[]', space=smem, size = 0x4, offset = 0x4, fixed_abs, tag = 'smem constant byte address 0x4 - core index']
  #allocation1 [shape = 'u32[144,128]{1,0:T(1,128)}', space=vmem, size = 0x12000, scoped, tag = 'internal scratch']
  %s0 = inlined_call_operand.vmem [shape: f32[8,1], index: 0, kind: input, shape index: {}]
  %s1 = inlined_call_operand.vmem [shape: f32[8,1], index: 1, kind: input, shape index: {}]
  %s2 = inlined_call_operand.vmem [shape: f32[8,256], index: 2, kind: input, shape index: {}]
  %s3 = inlined_call_operand.hbm [shape: f32[8,256], index: 3, kind: output, shape index: {}]
  %s4 = sld [smem:[#allocation0]]
  $region45: #{tpu_custom_call.1} parent=0
    _
  %s6 = ssub.s32 1, %s4
  %s7 = scalar_select 0, %s6, %s4
  $region1: #{tpu_custom_call.1} parent=0
    #allocation2 [shape = 'u8[8192]{0}', space=vmem, size = 0x2000, scoped, tag = 'output window, operand 0']
    #allocation3 [shape = 's32[2]{0}', space=sflag, size = 0x8, scoped, tag = 'scoped memory for tpu_custom_call.1']
    %8 = vsyncpa [#allocation3], 0
    %s9 = scalar_lea.sflag [#allocation3], 1
    %10 = vsyncpa %s9, 0
    loop: start=0, step=1, limit=4
    $region2: #{tpu_custom_call.1} parent=1 // loop_pre_header
      _
    $region3: #{tpu_custom_call.1} parent=1 // loop_header
      %s12 = sphi 0, %s16
      %p13 = scmp.ge.s32.totalorder %s12, 4
      %s19 = sphi 0, %s31
      %s20 = sphi 0, %s27
      %s21 = sphi 0, %s19
      %s22 = sphi 0, %s20
      %s23 = sphi 0, %s21
      %s24 = sphi 0, %s22
      %s32 = sphi 0, %s32
      %s34 = sphi 0, %s32
      %s35 = sphi 0, %s34
      %s49 = sphi 0, %s35
      %s53 = sphi 0, %s53
      %s55 = sphi 0, %s53
      %s56 = sphi 0, %s55
      %s70 = sphi 0, %s56
      %s78 = sphi 0, %s80
      %s81 = sphi 0, %s78
      %s82 = sphi 0, %s81
      %s98 = sphi 0, %s82
      %s106 = sphi 0, %s108
      %s109 = sphi 0, %s106
      %s110 = sphi 0, %s109
      %s126 = sphi 0, %s110
    $region4: #{tpu_custom_call.1} parent=1 // loop_header_branch
      %15 = sbr.rel (%p13) target = $region8
    $region5: #{tpu_custom_call.1} parent=1 // loop_body
      %s17 = ssub.s32 %s12, 1
      %s18 = ssub.s32 %s12, 2
      %s25 = sadd.s32 1, %s20
      %p26 = scmp.ge.s32.totalorder %s25, 2
      %s27 = scalar_select %p26, 0, %s25
      %s28 = sadd.s32 1, %s19
      %s29 = scalar_select %p26, %s28, %s19
      %p30 = scmp.ge.s32.totalorder %s29, 1
      %s31 = scalar_select %p30, 0, %s29
      %s33 = sadd.s32 %s32, 1
      %p36 = scmp.eq.s32.totalorder %s12, 1
      %p37 = scmp.ne.s32.totalorder %s32, %s34
      %p38 = scmp.eq.s32.totalorder %s12, 0
      %p39 = por %p37, %p38
      %p40 = scmp.ne.s32.totalorder %s32, %s34
      %p41 = scmp.eq.s32.totalorder %s17, 1
      %p42 = por %p40, %p41
      %p43 = scmp.ne.s32.totalorder %s34, %s35
      %p44 = scmp.eq.s32.totalorder %s17, 0
      %p45 = por %p43, %p44
      %p46 = scmp.ne.s32.totalorder %s34, %s35
      %p47 = scmp.eq.s32.totalorder %s18, 1
      %p48 = por %p46, %p47
      %p50 = scmp.ne.s32.totalorder %s35, %s49
      %p51 = scmp.eq.s32.totalorder %s18, 0
      %p52 = por %p50, %p51
      %s54 = sadd.s32 %s53, 1
      %p57 = scmp.eq.s32.totalorder %s12, 1
      %p58 = scmp.ne.s32.totalorder %s53, %s55
      %p59 = scmp.eq.s32.totalorder %s12, 0
      %p60 = por %p58, %p59
      %p61 = scmp.ne.s32.totalorder %s53, %s55
      %p62 = scmp.eq.s32.totalorder %s17, 1
      %p63 = por %p61, %p62
      %p64 = scmp.ne.s32.totalorder %s55, %s56
      %p65 = scmp.eq.s32.totalorder %s17, 0
      %p66 = por %p64, %p65
      %p67 = scmp.ne.s32.totalorder %s55, %s56
      %p68 = scmp.eq.s32.totalorder %s18, 1
      %p69 = por %p67, %p68
      %p71 = scmp.ne.s32.totalorder %s56, %s70
      %p72 = scmp.eq.s32.totalorder %s18, 0
      %p73 = por %p71, %p72
      %s74 = ssub.s32 %s19, %s31
      %s75 = ssub.s32 %s20, %s27
      %s76 = sor.u32 %s74, %s75
      %p77 = scmp.eq.s32.totalorder %s76, 0
      %s79 = sadd.s32 %s78, 1
      %s80 = scalar_select %p77, %s78, %s79
      %p83 = pneg %p77
      %p84 = scmp.eq.s32.totalorder %s12, 1
      %p85 = por %p83, %p84
      %p86 = scmp.ne.s32.totalorder %s78, %s81
      %p87 = scmp.eq.s32.totalorder %s12, 0
      %p88 = por %p86, %p87
      %p89 = scmp.ne.s32.totalorder %s78, %s81
      %p90 = scmp.eq.s32.totalorder %s17, 1
      %p91 = por %p89, %p90
      %p92 = scmp.ne.s32.totalorder %s81, %s82
      %p93 = scmp.eq.s32.totalorder %s17, 0
      %p94 = por %p92, %p93
      %p95 = scmp.ne.s32.totalorder %s81, %s82
      %p96 = scmp.eq.s32.totalorder %s18, 1
      %p97 = por %p95, %p96
      %p99 = scmp.ne.s32.totalorder %s82, %s98
      %p100 = scmp.eq.s32.totalorder %s18, 0
      %p101 = por %p99, %p100
      %s102 = ssub.s32 %s19, %s31
      %s103 = ssub.s32 %s20, %s27
      %s104 = sor.u32 %s102, %s103
      %p105 = scmp.eq.s32.totalorder %s104, 0
      %s107 = sadd.s32 %s106, 1
      %s108 = scalar_select %p105, %s106, %s107
      %p111 = pneg %p105
      %p112 = scmp.eq.s32.totalorder %s12, 1
      %p113 = por %p111, %p112
      %p114 = scmp.ne.s32.totalorder %s106, %s109
      %p115 = scmp.eq.s32.totalorder %s12, 0
      %p116 = por %p114, %p115
      %p117 = scmp.ne.s32.totalorder %s106, %s109
      %p118 = scmp.eq.s32.totalorder %s17, 1
      %p119 = por %p117, %p118
      %p120 = scmp.ne.s32.totalorder %s109, %s110
      %p121 = scmp.eq.s32.totalorder %s17, 0
      %p122 = por %p120, %p121
      %p123 = scmp.ne.s32.totalorder %s109, %s110
      %p124 = scmp.eq.s32.totalorder %s18, 1
      %p125 = por %p123, %p124
      %p127 = scmp.ne.s32.totalorder %s110, %s126
      %p128 = scmp.eq.s32.totalorder %s18, 0
      %p129 = por %p127, %p128
      %p130 = scmp.le.s32.totalorder 1, %s12
      %p131 = scmp.lt.s32.totalorder %s12, 3
      %p132 = pnand %p130, %p131
      %p133 = pneg %p132
      // Predicated region
      $region9: #{tpu_custom_call.1} parent=5 // pred_check
        _
      $region10: #{tpu_custom_call.1} parent=5 // pred_check_branch
        %135 = sbr.rel (%p132) target = $region12
      $region11: #{tpu_custom_call.1} parent=5 // pred_region
        %s136 = ssub.s32 %s12, 1
        // Predicated region
        $region13: #{tpu_custom_call.1} parent=11 // pred_check
          %p137 = pneg %p45
        $region14: #{tpu_custom_call.1} parent=11 // pred_check_branch
          %139 = sbr.rel (%p137) target = $region16
        $region15: #{tpu_custom_call.1} parent=11 // pred_region
          _
        $region16: #{tpu_custom_call.1} parent=11 // pred_fallthru
          _
        // Predicated region
        $region17: #{tpu_custom_call.1} parent=11 // pred_check
          %p140 = pneg %p66
        $region18: #{tpu_custom_call.1} parent=11 // pred_check_branch
          %142 = sbr.rel (%p140) target = $region20
        $region19: #{tpu_custom_call.1} parent=11 // pred_region
          _
        $region20: #{tpu_custom_call.1} parent=11 // pred_fallthru
          _
      $region12: #{tpu_custom_call.1} parent=5 // pred_fallthru
        _
      %p143 = scmp.lt.s32.totalorder %s12, 2
      // Predicated region
      $region21: #{tpu_custom_call.1} parent=5 // pred_check
        %p144 = pneg %p143
      $region22: #{tpu_custom_call.1} parent=5 // pred_check_branch
        %146 = sbr.rel (%p144) target = $region24
      $region23: #{tpu_custom_call.1} parent=5 // pred_region
        // Predicated region
        $region25: #{tpu_custom_call.1} parent=23 // pred_check
          %p147 = pneg %p88
        $region26: #{tpu_custom_call.1} parent=23 // pred_check_branch
          %149 = sbr.rel (%p147) target = $region28
        $region27: #{tpu_custom_call.1} parent=23 // pred_region
          %p150 = scmp.lt.s32.totalorder %s19, 0
          %s151 = scalar_select %p150, %s19, 0
          %p152 = scmp.lt.s32.totalorder %s20, 1
          %s153 = scalar_select %p152, %s20, 1
          %s154 = smul.addr %s151, 2
          %s155 = sadd.s32 %s153, %s154
          %s156 = smul.addr %s155, 8
          %s157 = scalar_lea.vmem %s2, %s156
        $region28: #{tpu_custom_call.1} parent=23 // pred_fallthru
          _
      $region24: #{tpu_custom_call.1} parent=5 // pred_fallthru
        _
      %p158 = scmp.le.s32.totalorder 1, %s12
      %p159 = scmp.lt.s32.totalorder %s12, 3
      %p160 = pnand %p158, %p159
      %p161 = pneg %p160
      // Predicated region
      $region29: #{tpu_custom_call.1} parent=5 // pred_check
        _
      $region30: #{tpu_custom_call.1} parent=5 // pred_check_branch
        %163 = sbr.rel (%p160) target = $region32
      $region31: #{tpu_custom_call.1} parent=5 // pred_region
        %s164 = ssub.s32 %s12, 1
        %p165 = pneg %p45
        %p166 = pneg %p42
        %p167 = pneg %p66
        %p168 = pneg %p63
        %p169 = scmp.lt.s32.totalorder %s21, 0
        %s170 = scalar_select %p169, %s21, 0
        %p171 = scmp.lt.s32.totalorder %s22, 1
        %s172 = scalar_select %p171, %s22, 1
        %s173 = smul.addr %s170, 2
        %s174 = sadd.s32 %s172, %s173
        %s175 = smul.addr %s174, 8
        %s176 = scalar_lea.vmem %s2, %s175
        %p177 = pneg %p94
        %p178 = pneg %p91
        %p179 = pneg %p122
        %p180 = pneg %p119
        %s181 = sand.u32 %s109, 1
        %s182 = scalar_lea.sflag [#allocation3], %s181
        %s183 = sand.u32 %s109, 1
        %s184 = smul.addr %s183, 8
        %s185 = scalar_lea.vmem [#allocation2], %s184
        %p186 = scmp.lt.s32.totalorder %s21, 0
        %s187 = scalar_select %p186, %s21, 0
        %p188 = scmp.lt.s32.totalorder %s22, 1
        %s189 = scalar_select %p188, %s22, 1
        %s190 = smul.addr %s187, 2
        %s191 = sadd.s32 %s189, %s190
        %s192 = smul.addr %s191, 8
        %s193 = scalar_lea.vmem %s2, %s192
        %v194 = vld [vmem:[%s0] sm:$0xff]
        %v195 = vld [vmem:[%s1] sm:$0xff]
        %v196 = vld [vmem:[%s193] sm:$0xff]
        %198 = vset.pattern.permute.xlu0 0
        %199 = vperm.xlu0 %198, %v194
        %v200 = vpop.permute.xlu0 %199
        %v202 = vmul.f32 %v196, %v200
        %204 = vset.pattern.permute.xlu0 0
        %205 = vperm.xlu0 %204, %v195
        %v206 = vpop.permute.xlu0 %205
        %v208 = vadd.f32 %v202, %v206
        %209 = vst [vmem:[%s185] sm:$0xff] %v208
        %s210 = sand.u32 %s109, 1
        %s211 = scalar_lea.sflag [#allocation3], %s210
        %s212 = sand.u32 %s109, 1
        %s213 = smul.addr %s212, 8
        %s214 = scalar_lea.vmem [#allocation2], %s213
        // Predicated region
        $region33: #{tpu_custom_call.1} parent=31 // pred_check
          %p215 = pneg %p119
        $region34: #{tpu_custom_call.1} parent=31 // pred_check_branch
          %217 = sbr.rel (%p215) target = $region36
        $region35: #{tpu_custom_call.1} parent=31 // pred_region
          %s219 = ssub.s32 128, 128
          %220 = vsyncadd %s211, %s219
          %s221 = smul.addr %s21, 2
          %s222 = sadd.s32 %s22, %s221
          %s223 = smul.addr %s222, 128
          %s224 = scalar_lea.hbm %s3, %s223
          %s226 = sshll.u32 %s214, 4
          %s227 = int_to_ptr.vmem [resolvable:$true] %s226
          %229 = dma.vmem_to_hbm [thread:$0]  %s227, 128, %s224, %s211
        $region36: #{tpu_custom_call.1} parent=31 // pred_fallthru
          _
      $region32: #{tpu_custom_call.1} parent=5 // pred_fallthru
        _
      %p230 = scmp.le.s32.totalorder 2, %s12
      // Predicated region
      $region37: #{tpu_custom_call.1} parent=5 // pred_check
        %p231 = pneg %p230
      $region38: #{tpu_custom_call.1} parent=5 // pred_check_branch
        %233 = sbr.rel (%p231) target = $region40
      $region39: #{tpu_custom_call.1} parent=5 // pred_region
        %s234 = ssub.s32 %s12, 2
        // Predicated region
        $region41: #{tpu_custom_call.1} parent=39 // pred_check
          %p235 = pneg %p125
        $region42: #{tpu_custom_call.1} parent=39 // pred_check_branch
          %237 = sbr.rel (%p235) target = $region44
        $region43: #{tpu_custom_call.1} parent=39 // pred_region
          %s238 = sand.u32 %s110, 1
          %s239 = scalar_lea.sflag [#allocation3], %s238
          %s240 = sand.u32 %s110, 1
          %s241 = smul.addr %s240, 8
          %s242 = scalar_lea.vmem [#allocation2], %s241
          %243 = dma.done %s239, 128
        $region44: #{tpu_custom_call.1} parent=39 // pred_fallthru
          _
      $region40: #{tpu_custom_call.1} parent=5 // pred_fallthru
        _
    $region6: #{tpu_custom_call.1} parent=1 // loop_footer
      %s16 = sadd.s32 1, %s12
    $region7: #{tpu_custom_call.1} parent=1 // loop_footer_branch
      %11 = sbr.rel target = $region3
    $region8: #{tpu_custom_call.1} parent=1 // loop_exit
      _
    %244 = vsyncpa [#allocation3], 1
    %s245 = scalar_lea.sflag [#allocation3], 1
    %246 = vsyncpa %s245, 1

</llo_original>
